<compile_context>
chip_gen: v7x
topology: tpu7x:2x2x1
jax: 0.10.0
libtpu: 0.0.40
codegen_flags: <defaults>
</compile_context>

<pallas_src>
import functools
import math

import jax
import jax.numpy as jnp
from jax import lax
from jax.experimental import pallas as pl
from jax.experimental.pallas import tpu as pltpu


def _round_up(v, m):
    return ((v + m - 1) // m) * m


def _vmem_capacity_bytes():
    try:
        cap = int(pltpu.get_tpu_info().vmem_capacity_bytes)
        if cap > 0:
            return cap
    except Exception:
        pass
    return 64 * 1024 * 1024  # conservative default (v7x physical VMEM per TC)


# =====================================================================
# Pallas kernel: fused im2col + per-sample conv-as-matmul
# =====================================================================

def _fused_conv_kernel(w_ref, x_ref, o_ref, *, k, Wp, tp, halo_pad, single_tile):
    # w_ref: (1, out_c, F2) bf16  per-sample aggregated weight, F2 = (kh,kw,c8) order
    # x_ref: (1, C8, L_pad) bf16  zero-padded image, (Hp, Wp) flattened onto lanes
    # o_ref: (1, out_c, tp) f32   columns are h*Wp + w (junk cols stripped outside)
    if single_tile:
        col0 = 0                                           # fully static slicing
    else:
        col0 = pl.multiple_of(pl.program_id(1) * tp, 128)  # 128-aligned tile base
    band = x_ref[0, :, pl.ds(col0, tp + halo_pad)]         # (C8, tp + halo_pad)
    # For stride=1, patch row (kh, kw, c) over this column tile is the band
    # shifted by the *static* offset kh*Wp + kw (contiguous lane slice).
    taps = [band[:, kh * Wp + kw: kh * Wp + kw + tp]
            for kh in range(k) for kw in range(k)]         # k*k x (C8, tp)
    patch = jnp.concatenate(taps, axis=0)                  # (F2, tp)
    o_ref[0] = jnp.dot(w_ref[0], patch,
                       preferred_element_type=jnp.float32).astype(o_ref.dtype)


# =====================================================================
# Tile choice / VMEM budgeting (per TPU generation)
# =====================================================================

def _choose_p_tile(P_pad, F2, out_c, C8, L_pad, B, budget):
    # Per-sample-resident blocks (double-buffered bf16 image + weight, plus the
    # loaded weight value).
    fixed = 2 * C8 * L_pad * 2 + 2 * out_c * F2 * 2 + out_c * F2 * 2
    # Per-lane-column bytes: patch build temporaries (~2x F2 rows bf16), band
    # slice (C8 rows bf16), f32 accumulator + double-buffered f32 output block.
    per_col = 2 * F2 * 2 + C8 * 2 + 3 * out_c * 4
    avail = max(budget - fixed, per_col * 128)
    tp_cap = max(128, min(P_pad, (avail // per_col) // 128 * 128))

    tp = 128
    d = tp_cap
    while d >= 128:
        if P_pad % d == 0:       # keep uniform, fully unmasked 128-multiple tiles
            tp = d
            break
        d -= 128

    # Guarantee >=2 total grid steps (two v7x TensorCores) when B == 1.
    if B == 1 and tp == P_pad and P_pad >= 256:
        d = (P_pad // 2) // 128 * 128
        while d >= 128:
            if P_pad % d == 0:
                tp = d
                break
            d -= 128
    return tp


# =====================================================================
# Fallback for configs the fused kernel does not cover
# =====================================================================

def _xla_grouped_conv(x, agg, stride, padding, dilation):
    B, C, H, W = x.shape
    out_c, kh, kw = agg.shape[1], agg.shape[3], agg.shape[4]
    out = lax.conv_general_dilated(
        x.reshape(1, B * C, H, W),
        agg.reshape(B * out_c, C, kh, kw),
        window_strides=(stride, stride),
        padding=[(padding, padding), (padding, padding)],
        rhs_dilation=(dilation, dilation),
        dimension_numbers=("NCHW", "OIHW", "NCHW"),
        feature_group_count=B)
    return out.reshape(B, out_c, out.shape[2], out.shape[3])


# =====================================================================
# Wrapper
# =====================================================================

def multi_lora_conv2d(x, alphas, conv_w, lora_A, lora_B, *, lora_alpha, r,
                      stride=1, padding=1, dilation=1):
    B, C, H, W = x.shape
    out_c, in_c, k, _ = conv_w.shape
    T = lora_A.shape[0]
    scaling = lora_alpha / r

    # ---- LoRA deltas + per-sample weight aggregation (tiny GEMMs; plain XLA) ----
    # torch's (B_t @ A_t).view(out_c, in_c, k, k) is a row-major reinterpretation,
    # so the JAX reshape below matches it exactly.
    delta = jnp.einsum('tor,tri->toi', lora_B, lora_A)              # (T, oc*k, ic*k)
    delta = (scaling * delta).reshape(T, out_c, in_c, k, k)
    agg = conv_w[None] + jnp.einsum('bt,toikl->boikl', alphas, delta)  # (B,oc,ic,k,k) f32

    if stride != 1 or dilation != 1:
        # TODO(synk): fused Pallas path covers stride=1, dilation=1 (the usual LoRA
        # conv); other configs fall back to an XLA grouped conv, same weights.
        return _xla_grouped_conv(x, agg, stride, padding, dilation)

    # ---- geometry (stride = 1) ----
    Hp, Wp = H + 2 * padding, W + 2 * padding
    H_out, W_out = Hp - k + 1, Wp - k + 1
    C8 = _round_up(C, 8)                       # sublane-aligned channel count
    F2 = k * k * C8
    P_cols = H_out * Wp                        # matmul columns incl. k-1 junk/row
    P_pad = _round_up(P_cols, 128)             # lane-dense, unmasked output tiles
    halo_pad = _round_up((k - 1) * Wp + (k - 1), 128)
    L_pad = P_pad + halo_pad

    # ---- weight: pad channels, reorder F to (kh, kw, c8), cast bf16 ----
    w8 = jnp.pad(agg, ((0, 0), (0, 0), (0, C8 - C), (0, 0), (0, 0)))
    w_perm = jnp.transpose(w8, (0, 1, 3, 4, 2)).reshape(B, out_c, F2)
    w_perm = w_perm.astype(jnp.bfloat16)

    # ---- input: spatial pad, flatten (Hp, Wp) onto lanes, pad channels + tail ----
    # TODO(synk): this pad/flatten pass costs ~2x|x| extra HBM traffic; it could be
    # fused into the kernel with boundary masking if it ever dominates profiles.
    xp = jnp.pad(x, ((0, 0), (0, 0), (padding, padding), (padding, padding)))
    xf = jnp.pad(xp.reshape(B, C, Hp * Wp),
                 ((0, 0), (0, C8 - C), (0, L_pad - Hp * Wp))).astype(jnp.bfloat16)

    # ---- tile + VMEM budget derived from this generation's VMEM capacity ----
    vmem_phys = _vmem_capacity_bytes()
    tp = _choose_p_tile(P_pad, F2, out_c, C8, L_pad, B, budget=int(0.45 * vmem_phys))
    n_pt = P_pad // tp
    est = (2 * C8 * L_pad * 2 + 3 * out_c * F2 * 2
           + 2 * F2 * tp * 2 + C8 * (tp + halo_pad) * 2 + 3 * out_c * tp * 4)
    vmem_limit = int(min(0.8 * vmem_phys, max(2 * est, 16 * 1024 * 1024)))

    kernel = functools.partial(_fused_conv_kernel, k=k, Wp=Wp, tp=tp,
                               halo_pad=halo_pad, single_tile=(n_pt == 1))
    cost = pl.CostEstimate(
        flops=2 * B * out_c * F2 * P_pad,
        bytes_accessed=w_perm.size * 2 + xf.size * 2 + B * out_c * P_pad * 4,
        transcendentals=0)

    out_flat = pl.pallas_call(
        kernel,
        out_shape=jax.ShapeDtypeStruct((B, out_c, P_pad), jnp.float32),
        grid=(B, n_pt),
        in_specs=[
            pl.BlockSpec((1, out_c, F2), lambda b, p: (b, 0, 0)),   # per-sample weight
            pl.BlockSpec((1, C8, L_pad), lambda b, p: (b, 0, 0)),   # whole flat image
        ],
        out_specs=pl.BlockSpec((1, out_c, tp), lambda b, p: (b, 0, p)),
        compiler_params=pltpu.CompilerParams(
            dimension_semantics=("parallel", "parallel"),
            vmem_limit_bytes=vmem_limit),
        cost_estimate=cost,
    )(w_perm, xf)

    # Strip the per-row junk columns (Wp vs W_out pitch) and the 128-pad tail;
    # the result reshapes directly to NCHW (no transpose).
    out = out_flat[:, :, :P_cols].reshape(B, out_c, H_out, Wp)[:, :, :, :W_out]
    return out


# =====================================================================
# Pure-JAX reference (mirrors the PyTorch forward, f32 throughout)
# =====================================================================

def reference(x, alphas, conv_w, lora_A, lora_B, *, lora_alpha, r,
              stride, padding):
    B = x.shape[0]
    out_c, in_c, k, _ = conv_w.shape
    T = lora_A.shape[0]
    scaling = lora_alpha / r
    delta = jnp.stack(
        [scaling * (lora_B[t] @ lora_A[t]).reshape(out_c, in_c, k, k)
         for t in range(T)], axis=0)
    agg = conv_w[None] + jnp.sum(
        delta[None] * alphas[:, :, None, None, None, None], axis=1)
    outs = []
    for b in range(B):
        outs.append(lax.conv_general_dilated(
            x[b:b + 1], agg[b], (stride, stride),
            [(padding, padding), (padding, padding)],
            dimension_numbers=("NCHW", "OIHW", "NCHW")))
    return jnp.concatenate(outs, axis=0)


if __name__ == "__main__":
    key = jax.random.PRNGKey(0)
    batch, in_c, out_c, k = 2, 4, 8, 3
    H = W = 16
    num_task, r, lora_alpha = 3, 2, 4
    stride, padding = 1, 1

    k1, k2, k3, k4, k5 = jax.random.split(key, 5)
    x = jax.random.normal(k1, (batch, in_c, H, W), jnp.float32)
    alphas = jax.nn.softmax(
        jax.random.normal(k2, (batch, num_task), jnp.float32), axis=-1)
    conv_w = 0.1 * jax.random.normal(k3, (out_c, in_c, k, k), jnp.float32)

    # Module parameter shapes per task: lora_A (r*k, in_c*k), lora_B (out_c*k, r*k).
    # reset_parameters() zeroes lora_B; use deterministic random values so the
    # LoRA path is actually exercised (synthetic init, no checkpoint).
    bound = 1.0 / math.sqrt(in_c * k)
    lora_A = jax.random.uniform(k4, (num_task, r * k, in_c * k), jnp.float32,
                                minval=-bound, maxval=bound)
    lora_B = 0.1 * jax.random.normal(k5, (num_task, out_c * k, r * k), jnp.float32)
    # TODO(synk): conv bias omitted — the reference F.conv2d(..., groups=batch)
    # call only type-checks when conv.bias is None (it would need batch*out_c).

    out = multi_lora_conv2d(x, alphas, conv_w, lora_A, lora_B,
                            lora_alpha=lora_alpha, r=r,
                            stride=stride, padding=padding)
    out = jax.block_until_ready(out)

    ref = reference(x, alphas, conv_w, lora_A, lora_B,
                    lora_alpha=lora_alpha, r=r, stride=stride, padding=padding)
    assert out.shape == (batch, out_c, H, W), out.shape
    max_err = float(jnp.max(jnp.abs(out - ref)))
    # bf16 MXU operands vs f32 reference -> allow ~1e-2 absolute error.
    assert jnp.allclose(out, ref, rtol=2e-2, atol=2e-2), max_err
    print("KERNEL_OK")
</pallas_src>

<mosaic_0001>
module attributes {stable_mosaic.version = 11 : i64} {
  func.func @_fused_conv_kernel(%arg0: i32, %arg1: i32, %arg2: memref<1x8x72xbf16, #tpu.memory_space<vmem>>, %arg3: memref<1x8x512xbf16, #tpu.memory_space<vmem>>, %arg4: memref<1x8x384xf32, #tpu.memory_space<vmem>>) attributes {dimension_semantics = [#tpu.dimension_semantics<parallel>, #tpu.dimension_semantics<parallel>], iteration_bounds = array<i64: 2, 1>, scalar_prefetch = 0 : i64, scratch_operands = 0 : i64, tpu.core_type = #tpu.core_type<tc>, window_params = [{transform_indices = @transform_0, window_bounds = array<i64: 1, 8, 72>}, {transform_indices = @transform_1, window_bounds = array<i64: 1, 8, 512>}, {transform_indices = @transform_2, window_bounds = array<i64: 1, 8, 384>}]} {
    %c0 = arith.constant 0 : index
    %c0_0 = arith.constant 0 : index
    %c0_1 = arith.constant 0 : index
    %0 = vector.load %arg3[%c0, %c0_0, %c0_1] : memref<1x8x512xbf16, #tpu.memory_space<vmem>>, vector<1x8x512xbf16>
    %1 = vector.shape_cast %0 : vector<1x8x512xbf16> to vector<8x512xbf16>
    %2 = vector.extract_strided_slice %1 {offsets = [0, 0], sizes = [8, 384], strides = [1, 1]} : vector<8x512xbf16> to vector<8x384xbf16>
    %3 = vector.extract_strided_slice %1 {offsets = [0, 1], sizes = [8, 384], strides = [1, 1]} : vector<8x512xbf16> to vector<8x384xbf16>
    %4 = vector.extract_strided_slice %1 {offsets = [0, 2], sizes = [8, 384], strides = [1, 1]} : vector<8x512xbf16> to vector<8x384xbf16>
    %5 = vector.extract_strided_slice %1 {offsets = [0, 18], sizes = [8, 384], strides = [1, 1]} : vector<8x512xbf16> to vector<8x384xbf16>
    %6 = vector.extract_strided_slice %1 {offsets = [0, 19], sizes = [8, 384], strides = [1, 1]} : vector<8x512xbf16> to vector<8x384xbf16>
    %7 = vector.extract_strided_slice %1 {offsets = [0, 20], sizes = [8, 384], strides = [1, 1]} : vector<8x512xbf16> to vector<8x384xbf16>
    %8 = vector.extract_strided_slice %1 {offsets = [0, 36], sizes = [8, 384], strides = [1, 1]} : vector<8x512xbf16> to vector<8x384xbf16>
    %9 = vector.extract_strided_slice %1 {offsets = [0, 37], sizes = [8, 384], strides = [1, 1]} : vector<8x512xbf16> to vector<8x384xbf16>
    %10 = vector.extract_strided_slice %1 {offsets = [0, 38], sizes = [8, 384], strides = [1, 1]} : vector<8x512xbf16> to vector<8x384xbf16>
    %11 = tpu.concatenate %2, %3, %4, %5, %6, %7, %8, %9, %10 in 0 : vector<8x384xbf16>, vector<8x384xbf16>, vector<8x384xbf16>, vector<8x384xbf16>, vector<8x384xbf16>, vector<8x384xbf16>, vector<8x384xbf16>, vector<8x384xbf16>, vector<8x384xbf16> -> vector<72x384xbf16>
    %c0_2 = arith.constant 0 : index
    %c0_3 = arith.constant 0 : index
    %c0_4 = arith.constant 0 : index
    %12 = vector.load %arg2[%c0_2, %c0_3, %c0_4] : memref<1x8x72xbf16, #tpu.memory_space<vmem>>, vector<1x8x72xbf16>
    %13 = vector.shape_cast %12 : vector<1x8x72xbf16> to vector<8x72xbf16>
    %cst = arith.constant dense<0.000000e+00> : vector<8x384xf32>
    %14 = tpu.matmul %13, %11, %cst {dimension_numbers = #tpu.dot_dimension_numbers<[1], [0], [0], [1], [0, 0, 1, 1], [], []>} : vector<8x72xbf16>, vector<72x384xbf16>, vector<8x384xf32> -> vector<8x384xf32>
    %c0_5 = arith.constant 0 : index
    %c0_6 = arith.constant 0 : index
    %c0_7 = arith.constant 0 : index
    %15 = vector.load %arg4[%c0_5, %c0_6, %c0_7] : memref<1x8x384xf32, #tpu.memory_space<vmem>>, vector<1x8x384xf32>
    %16 = vector.shape_cast %15 : vector<1x8x384xf32> to vector<8x384xf32>
    %17 = vector.shape_cast %14 : vector<8x384xf32> to vector<1x8x384xf32>
    tpu.vector_store %arg4[%c0_5, %c0_6, %c0_7], %17 {strides = array<i32>} : memref<1x8x384xf32, #tpu.memory_space<vmem>>, vector<1x8x384xf32>,
    return
  }
  func.func @transform_0(%arg0: i32, %arg1: i32) -> (i32, i32, i32) {
    %c0_i32 = arith.constant 0 : i32
    %c0_i32_0 = arith.constant 0 : i32
    %c0_i32_1 = arith.constant 0 : i32
    return %arg0, %c0_i32, %c0_i32_0 : i32, i32, i32
  }
  func.func @transform_1(%arg0: i32, %arg1: i32) -> (i32, i32, i32) {
    %c0_i32 = arith.constant 0 : i32
    %c0_i32_0 = arith.constant 0 : i32
    %c0_i32_1 = arith.constant 0 : i32
    return %arg0, %c0_i32, %c0_i32_0 : i32, i32, i32
  }
  func.func @transform_2(%arg0: i32, %arg1: i32) -> (i32, i32, i32) {
    %c0_i32 = arith.constant 0 : i32
    %c0_i32_0 = arith.constant 0 : i32
    return %arg0, %c0_i32, %arg1 : i32, i32, i32
  }
}

</mosaic_0001>

<llo_original>
// kernel: tpu_custom_call.1
$region0: #{tpu_custom_call.1}
  #allocation0 [shape = 'u32[]', space=smem, size = 0x4, offset = 0x4, fixed_abs, tag = 'smem constant byte address 0x4 - core index']
  #allocation1 [shape = 'u32[144,128]{1,0:T(1,128)}', space=vmem, size = 0x12000, scoped, tag = 'internal scratch']
  %s0 = inlined_call_operand.hbm [shape: bf16[2,8,72], index: 0, kind: input, shape index: {}]
  %s1 = inlined_call_operand.hbm [shape: bf16[2,8,512], index: 1, kind: input, shape index: {}]
  %s2 = inlined_call_operand.hbm [shape: f32[2,8,384], index: 2, kind: output, shape index: {}]
  %s3 = sld [smem:[#allocation0]]
  $region49: #{tpu_custom_call.1} parent=0
    _
  %s5 = ssub.s32 1, %s3
  %s6 = scalar_select 0, %s5, %s3
  $region1: #{tpu_custom_call.1} parent=0
    #allocation2 [shape = 'u8[4096]{0}', space=vmem, size = 0x1000, scoped, tag = 'input window, operand 0']
    #allocation3 [shape = 's32[2]{0}', space=sflag, size = 0x8, scoped, tag = 'scoped memory for tpu_custom_call.1']
    #allocation4 [shape = 's32[2]{0}', space=sflag, size = 0x8, scoped, tag = 'scoped memory for tpu_custom_call.1']
    #allocation5 [shape = 'u8[16384]{0}', space=vmem, size = 0x4000, scoped, tag = 'input window, operand 1']
    #allocation6 [shape = 's32[2]{0}', space=sflag, size = 0x8, scoped, tag = 'scoped memory for tpu_custom_call.1']
    #allocation7 [shape = 'u8[24576]{0}', space=vmem, size = 0x6000, scoped, tag = 'output window, operand 0']
    %7 = vsyncpa [#allocation3], 0
    %s8 = scalar_lea.sflag [#allocation3], 1
    %9 = vsyncpa %s8, 0
    %10 = vsyncpa [#allocation6], 0
    %s11 = scalar_lea.sflag [#allocation6], 1
    %12 = vsyncpa %s11, 0
    %13 = vsyncpa [#allocation4], 0
    %s14 = scalar_lea.sflag [#allocation4], 1
    %15 = vsyncpa %s14, 0
    loop: start=0, step=1, limit=4
    $region2: #{tpu_custom_call.1} parent=1 // loop_pre_header
      _
    $region3: #{tpu_custom_call.1} parent=1 // loop_header
      %s17 = sphi 0, %s21
      %p18 = scmp.ge.s32.totalorder %s17, 4
      %s24 = sphi 0, %s36
      %s25 = sphi 0, %s32
      %s26 = sphi 0, %s24
      %s27 = sphi 0, %s25
      %s28 = sphi 0, %s26
      %s29 = sphi 0, %s27
      %s39 = sphi 0, %s41
      %s42 = sphi 0, %s39
      %s43 = sphi 0, %s42
      %s59 = sphi 0, %s43
      %s65 = sphi 0, %s67
      %s68 = sphi 0, %s65
      %s69 = sphi 0, %s68
      %s85 = sphi 0, %s69
      %s93 = sphi 0, %s95
      %s96 = sphi 0, %s93
      %s97 = sphi 0, %s96
      %s113 = sphi 0, %s97
    $region4: #{tpu_custom_call.1} parent=1 // loop_header_branch
      %20 = sbr.rel (%p18) target = $region8
    $region5: #{tpu_custom_call.1} parent=1 // loop_body
      %s22 = ssub.s32 %s17, 1
      %s23 = ssub.s32 %s17, 2
      %s30 = sadd.s32 1, %s25
      %p31 = scmp.ge.s32.totalorder %s30, 1
      %s32 = scalar_select %p31, 0, %s30
      %s33 = sadd.s32 1, %s24
      %s34 = scalar_select %p31, %s33, %s24
      %p35 = scmp.ge.s32.totalorder %s34, 2
      %s36 = scalar_select %p35, 0, %s34
      %s37 = ssub.s32 %s24, %s36
      %p38 = scmp.eq.s32.totalorder %s37, 0
      %s40 = sadd.s32 %s39, 1
      %s41 = scalar_select %p38, %s39, %s40
      %p44 = pneg %p38
      %p45 = scmp.eq.s32.totalorder %s17, 1
      %p46 = por %p44, %p45
      %p47 = scmp.ne.s32.totalorder %s39, %s42
      %p48 = scmp.eq.s32.totalorder %s17, 0
      %p49 = por %p47, %p48
      %p50 = scmp.ne.s32.totalorder %s39, %s42
      %p51 = scmp.eq.s32.totalorder %s22, 1
      %p52 = por %p50, %p51
      %p53 = scmp.ne.s32.totalorder %s42, %s43
      %p54 = scmp.eq.s32.totalorder %s22, 0
      %p55 = por %p53, %p54
      %p56 = scmp.ne.s32.totalorder %s42, %s43
      %p57 = scmp.eq.s32.totalorder %s23, 1
      %p58 = por %p56, %p57
      %p60 = scmp.ne.s32.totalorder %s43, %s59
      %p61 = scmp.eq.s32.totalorder %s23, 0
      %p62 = por %p60, %p61
      %s63 = ssub.s32 %s24, %s36
      %p64 = scmp.eq.s32.totalorder %s63, 0
      %s66 = sadd.s32 %s65, 1
      %s67 = scalar_select %p64, %s65, %s66
      %p70 = pneg %p64
      %p71 = scmp.eq.s32.totalorder %s17, 1
      %p72 = por %p70, %p71
      %p73 = scmp.ne.s32.totalorder %s65, %s68
      %p74 = scmp.eq.s32.totalorder %s17, 0
      %p75 = por %p73, %p74
      %p76 = scmp.ne.s32.totalorder %s65, %s68
      %p77 = scmp.eq.s32.totalorder %s22, 1
      %p78 = por %p76, %p77
      %p79 = scmp.ne.s32.totalorder %s68, %s69
      %p80 = scmp.eq.s32.totalorder %s22, 0
      %p81 = por %p79, %p80
      %p82 = scmp.ne.s32.totalorder %s68, %s69
      %p83 = scmp.eq.s32.totalorder %s23, 1
      %p84 = por %p82, %p83
      %p86 = scmp.ne.s32.totalorder %s69, %s85
      %p87 = scmp.eq.s32.totalorder %s23, 0
      %p88 = por %p86, %p87
      %s89 = ssub.s32 %s24, %s36
      %s90 = ssub.s32 %s25, %s32
      %s91 = sor.u32 %s89, %s90
      %p92 = scmp.eq.s32.totalorder %s91, 0
      %s94 = sadd.s32 %s93, 1
      %s95 = scalar_select %p92, %s93, %s94
      %p98 = pneg %p92
      %p99 = scmp.eq.s32.totalorder %s17, 1
      %p100 = por %p98, %p99
      %p101 = scmp.ne.s32.totalorder %s93, %s96
      %p102 = scmp.eq.s32.totalorder %s17, 0
      %p103 = por %p101, %p102
      %p104 = scmp.ne.s32.totalorder %s93, %s96
      %p105 = scmp.eq.s32.totalorder %s22, 1
      %p106 = por %p104, %p105
      %p107 = scmp.ne.s32.totalorder %s96, %s97
      %p108 = scmp.eq.s32.totalorder %s22, 0
      %p109 = por %p107, %p108
      %p110 = scmp.ne.s32.totalorder %s96, %s97
      %p111 = scmp.eq.s32.totalorder %s23, 1
      %p112 = por %p110, %p111
      %p114 = scmp.ne.s32.totalorder %s97, %s113
      %p115 = scmp.eq.s32.totalorder %s23, 0
      %p116 = por %p114, %p115
      %p117 = scmp.le.s32.totalorder 1, %s17
      %p118 = scmp.lt.s32.totalorder %s17, 3
      %p119 = pnand %p117, %p118
      %p120 = pneg %p119
      // Predicated region
      $region9: #{tpu_custom_call.1} parent=5 // pred_check
        _
      $region10: #{tpu_custom_call.1} parent=5 // pred_check_branch
        %122 = sbr.rel (%p119) target = $region12
      $region11: #{tpu_custom_call.1} parent=5 // pred_region
        %s123 = ssub.s32 %s17, 1
      $region12: #{tpu_custom_call.1} parent=5 // pred_fallthru
        _
      %p124 = scmp.lt.s32.totalorder %s17, 2
      // Predicated region
      $region13: #{tpu_custom_call.1} parent=5 // pred_check
        %p125 = pneg %p124
      $region14: #{tpu_custom_call.1} parent=5 // pred_check_branch
        %127 = sbr.rel (%p125) target = $region16
      $region15: #{tpu_custom_call.1} parent=5 // pred_region
        // Predicated region
        $region17: #{tpu_custom_call.1} parent=15 // pred_check
          %p128 = pneg %p49
        $region18: #{tpu_custom_call.1} parent=15 // pred_check_branch
          %130 = sbr.rel (%p128) target = $region20
        $region19: #{tpu_custom_call.1} parent=15 // pred_region
          %s131 = sand.u32 %s39, 1
          %s132 = scalar_lea.sflag [#allocation3], %s131
          %s133 = sand.u32 %s39, 1
          %s134 = smul.addr %s133, 4
          %s135 = scalar_lea.vmem [#allocation2], %s134
          %s137 = ssub.s32 64, 64
          %138 = vsyncadd %s132, %s137
          %s139 = smul.addr %s24, 64
          %s140 = scalar_lea.hbm %s0, %s139
          %s142 = sshll.u32 %s135, 4
          %s143 = int_to_ptr.vmem [resolvable:$true] %s142
          %145 = dma.hbm_to_vmem [thread:$0]  %s140, 64, %s143, %s132
        $region20: #{tpu_custom_call.1} parent=15 // pred_fallthru
          _
        // Predicated region
        $region21: #{tpu_custom_call.1} parent=15 // pred_check
          %p146 = pneg %p75
        $region22: #{tpu_custom_call.1} parent=15 // pred_check_branch
          %148 = sbr.rel (%p146) target = $region24
        $region23: #{tpu_custom_call.1} parent=15 // pred_region
          %s149 = sand.u32 %s65, 1
          %s150 = scalar_lea.sflag [#allocation6], %s149
          %s151 = sand.u32 %s65, 1
          %s152 = smul.addr %s151, 16
          %s153 = scalar_lea.vmem [#allocation5], %s152
          %s155 = ssub.s32 256, 256
          %156 = vsyncadd %s150, %s155
          %s157 = smul.addr %s24, 4
          %s158 = smul.addr %s157, 64
          %s159 = scalar_lea.hbm %s1, %s158
          %s161 = sshll.u32 %s153, 4
          %s162 = int_to_ptr.vmem [resolvable:$true] %s161
          %164 = dma.hbm_to_vmem [thread:$0]  %s159, 256, %s162, %s150
        $region24: #{tpu_custom_call.1} parent=15 // pred_fallthru
          _
      $region16: #{tpu_custom_call.1} parent=5 // pred_fallthru
        _
      %p165 = scmp.le.s32.totalorder 1, %s17
      %p166 = scmp.lt.s32.totalorder %s17, 3
      %p167 = pnand %p165, %p166
      %p168 = pneg %p167
      // Predicated region
      $region25: #{tpu_custom_call.1} parent=5 // pred_check
        _
      $region26: #{tpu_custom_call.1} parent=5 // pred_check_branch
        %170 = sbr.rel (%p167) target = $region28
      $region27: #{tpu_custom_call.1} parent=5 // pred_region
        %s171 = ssub.s32 %s17, 1
        %s172 = sand.u32 %s42, 1
        %s173 = scalar_lea.sflag [#allocation3], %s172
        %s174 = sand.u32 %s42, 1
        %s175 = smul.addr %s174, 4
        %s176 = scalar_lea.vmem [#allocation2], %s175
        // Predicated region
        $region29: #{tpu_custom_call.1} parent=27 // pred_check
          %p177 = pneg %p55
        $region30: #{tpu_custom_call.1} parent=27 // pred_check_branch
          %179 = sbr.rel (%p177) target = $region32
        $region31: #{tpu_custom_call.1} parent=27 // pred_region
          %180 = dma.done %s173, 64
        $region32: #{tpu_custom_call.1} parent=27 // pred_fallthru
          _
        %s181 = sand.u32 %s68, 1
        %s182 = scalar_lea.sflag [#allocation6], %s181
        %s183 = sand.u32 %s68, 1
        %s184 = smul.addr %s183, 16
        %s185 = scalar_lea.vmem [#allocation5], %s184
        // Predicated region
        $region33: #{tpu_custom_call.1} parent=27 // pred_check
          %p186 = pneg %p81
        $region34: #{tpu_custom_call.1} parent=27 // pred_check_branch
          %188 = sbr.rel (%p186) target = $region36
        $region35: #{tpu_custom_call.1} parent=27 // pred_region
          %189 = dma.done %s182, 256
        $region36: #{tpu_custom_call.1} parent=27 // pred_fallthru
          _
        %s190 = sand.u32 %s42, 1
        %s191 = scalar_lea.sflag [#allocation3], %s190
        %s192 = sand.u32 %s42, 1
        %s193 = smul.addr %s192, 4
        %s194 = scalar_lea.vmem [#allocation2], %s193
        %p195 = pneg %p55
        %p196 = pneg %p52
        %s197 = sand.u32 %s68, 1
        %s198 = scalar_lea.sflag [#allocation6], %s197
        %s199 = sand.u32 %s68, 1
        %s200 = smul.addr %s199, 16
        %s201 = scalar_lea.vmem [#allocation5], %s200
        %p202 = pneg %p81
        %p203 = pneg %p78
        %p204 = pneg %p109
        %p205 = pneg %p106
        %s206 = sand.u32 %s96, 1
        %s207 = scalar_lea.sflag [#allocation4], %s206
        %s208 = sand.u32 %s96, 1
        %s209 = smul.addr %s208, 24
        %s210 = scalar_lea.vmem [#allocation7], %s209
        %s211 = smul.u32 3, %s27
        %v213 = vld [vmem:[%s185] sm:$0xff]
        %v214 = vld [vmem:[%s185 + $0x8] sm:$0xff]
        %v217 = vunpack.c.l.b16 %v213
        %v218 = vunpack.c.h.b16 %v213
        %v219 = vunpack.c.l.b16 %v214
        %v220 = vpack.c.b16 %v217, %v217
        %v221 = vpack.c.b16 %v218, %v218
        %v222 = vpack.c.b16 %v219, %v219
        %v223 = vunpack.c.h.b16 %v214
        %v224 = vpack.c.b16 %v223, %v223
        %225 = vrot.lane.b32.xlu0 %v220, 127
        %v226 = vpop.permute.xlu0 %225
        %227 = vrot.lane.b32.xlu0 %v221, 127
        %v228 = vpop.permute.xlu0 %227
        %229 = vrot.lane.b32.xlu0 %v222, 127
        %v230 = vpop.permute.xlu0 %229
        %231 = vrot.lane.b32.xlu0 %v224, 127
        %v232 = vpop.permute.xlu0 %231
        %vm233 = vcmask 1039360
        %v234 = vsel %vm233, %v226, %v228
        %v235 = vsel %vm233, %v228, %v230
        %v236 = vsel %vm233, %v230, %v232
        %237 = vrot.lane.b32.xlu0 %v220, 126
        %v238 = vpop.permute.xlu0 %237
        %239 = vrot.lane.b32.xlu0 %v221, 126
        %v240 = vpop.permute.xlu0 %239
        %241 = vrot.lane.b32.xlu0 %v222, 126
        %v242 = vpop.permute.xlu0 %241
        %243 = vrot.lane.b32.xlu0 %v224, 126
        %v244 = vpop.permute.xlu0 %243
        %vm245 = vcmask 1031168
        %v246 = vsel %vm245, %v238, %v240
        %v247 = vsel %vm245, %v240, %v242
        %v248 = vsel %vm245, %v242, %v244
        %249 = vrot.lane.b32.xlu0 %v220, 110
        %v250 = vpop.permute.xlu0 %249
        %251 = vrot.lane.b32.xlu0 %v221, 110
        %v252 = vpop.permute.xlu0 %251
        %253 = vrot.lane.b32.xlu0 %v222, 110
        %v254 = vpop.permute.xlu0 %253
        %255 = vrot.lane.b32.xlu0 %v224, 110
        %v256 = vpop.permute.xlu0 %255
        %vm257 = vcmask 900096
        %v258 = vsel %vm257, %v250, %v252
        %v259 = vsel %vm257, %v252, %v254
        %v260 = vsel %vm257, %v254, %v256
        %261 = vrot.lane.b32.xlu0 %v220, 109
        %v262 = vpop.permute.xlu0 %261
        %263 = vrot.lane.b32.xlu0 %v221, 109
        %v264 = vpop.permute.xlu0 %263
        %265 = vrot.lane.b32.xlu0 %v222, 109
        %v266 = vpop.permute.xlu0 %265
        %267 = vrot.lane.b32.xlu0 %v224, 109
        %v268 = vpop.permute.xlu0 %267
        %vm269 = vcmask 891904
        %v270 = vsel %vm269, %v262, %v264
        %v271 = vsel %vm269, %v264, %v266
        %v272 = vsel %vm269, %v266, %v268
        %273 = vrot.lane.b32.xlu0 %v220, 108
        %v274 = vpop.permute.xlu0 %273
        %275 = vrot.lane.b32.xlu0 %v221, 108
        %v276 = vpop.permute.xlu0 %275
        %277 = vrot.lane.b32.xlu0 %v222, 108
        %v278 = vpop.permute.xlu0 %277
        %279 = vrot.lane.b32.xlu0 %v224, 108
        %v280 = vpop.permute.xlu0 %279
        %vm281 = vcmask 883712
        %v282 = vsel %vm281, %v274, %v276
        %v283 = vsel %vm281, %v276, %v278
        %v284 = vsel %vm281, %v278, %v280
        %285 = vrot.lane.b32.xlu0 %v220, 92
        %v286 = vpop.permute.xlu0 %285
        %287 = vrot.lane.b32.xlu0 %v221, 92
        %v288 = vpop.permute.xlu0 %287
        %289 = vrot.lane.b32.xlu0 %v222, 92
        %v290 = vpop.permute.xlu0 %289
        %291 = vrot.lane.b32.xlu0 %v224, 92
        %v292 = vpop.permute.xlu0 %291
        %vm293 = vcmask 752640
        %v294 = vsel %vm293, %v286, %v288
        %v295 = vsel %vm293, %v288, %v290
        %v296 = vsel %vm293, %v290, %v292
        %297 = vrot.lane.b32.xlu0 %v220, 91
        %v298 = vpop.permute.xlu0 %297
        %299 = vrot.lane.b32.xlu0 %v221, 91
        %v300 = vpop.permute.xlu0 %299
        %301 = vrot.lane.b32.xlu0 %v222, 91
        %v302 = vpop.permute.xlu0 %301
        %303 = vrot.lane.b32.xlu0 %v224, 91
        %v304 = vpop.permute.xlu0 %303
        %vm305 = vcmask 744448
        %v306 = vsel %vm305, %v298, %v300
        %v307 = vsel %vm305, %v300, %v302
        %v308 = vsel %vm305, %v302, %v304
        %309 = vrot.lane.b32.xlu0 %v220, 90
        %v310 = vpop.permute.xlu0 %309
        %311 = vrot.lane.b32.xlu0 %v221, 90
        %v312 = vpop.permute.xlu0 %311
        %313 = vrot.lane.b32.xlu0 %v222, 90
        %v314 = vpop.permute.xlu0 %313
        %315 = vrot.lane.b32.xlu0 %v224, 90
        %v316 = vpop.permute.xlu0 %315
        %vm317 = vcmask 736256
        %v318 = vsel %vm317, %v310, %v312
        %v319 = vsel %vm317, %v312, %v314
        %v320 = vsel %vm317, %v314, %v316
        %vm321 = vcmask 1043456
        %v324 = vsel %vm321, %v220, %v234
        %v328 = vsel %vm321, %v221, %v235
        %v332 = vsel %vm321, %v222, %v236
        %v336 = vsel %vm321, %v246, %v258
        %v340 = vsel %vm321, %v247, %v259
        %v344 = vsel %vm321, %v248, %v260
        %v348 = vsel %vm321, %v270, %v282
        %v352 = vsel %vm321, %v271, %v283
        %v356 = vsel %vm321, %v272, %v284
        %v360 = vsel %vm321, %v294, %v306
        %v364 = vsel %vm321, %v295, %v307
        %v368 = vsel %vm321, %v296, %v308
        %v370 = vld [vmem:[%s176] sm:$0xf]
        %vm371 = vcmask 588800
        %v373 = vsel %vm371, %v370, 0
        %v376 = vsel %vm321, %v318, 0
        %v379 = vsel %vm321, %v319, 0
        %v382 = vsel %vm321, %v320, 0
        %384 = vmatprep.subr.bf16.mxu0 %v328
        %385 = vmatpush1.bf16.msra.mxu0 %v324
        %386 = vmatprep.subr.bf16.mxu0 %v340
        %387 = vmatpush1.bf16.msra.mxu0 %v336
        %388 = vmatprep.subr.bf16.mxu0 %v352
        %389 = vmatpush1.bf16.msra.mxu0 %v348
        %390 = vmatprep.subr.bf16.mxu0 %v364
        %391 = vmatpush1.bf16.msra.mxu0 %v360
        %392 = vmatprep.subr.bf16.mxu0 %v379
        %393 = vmatpush1.bf16.msra.mxu0 %v376
        %394 = vmatprep.subr.bf16.mxu0 0
        %395 = vmatpush1.bf16.msra.mxu0 0
        %396 = vmatprep.subr.bf16.mxu0 0
        %397 = vmatpush1.bf16.msra.mxu0 0
        %398 = vmatprep.subr.bf16.mxu0 0
        %399 = vmatpush1.bf16.msra.mxu0 0
        %400 = vmatprep.subr.bf16.mxu0 0
        %401 = vmatpush1.bf16.msra.mxu0 0
        %402 = vmatprep.subr.bf16.mxu0 0
        %403 = vmatpush1.bf16.msra.mxu0 0
        %404 = vmatprep.subr.bf16.mxu0 0
        %405 = vmatpush1.bf16.msra.mxu0 0
        %406 = vmatprep.subr.bf16.mxu0 0
        %407 = vmatpush1.bf16.msra.mxu0 0
        %408 = vmatprep.subr.bf16.mxu0 0
        %409 = vmatpush1.bf16.msra.mxu0 0
        %410 = vmatprep.subr.bf16.mxu0 0
        %411 = vmatpush1.bf16.msra.mxu0 0
        %412 = vmatprep.subr.bf16.mxu0 0
        %413 = vmatpush1.bf16.msra.mxu0 0
        %414 = vmatprep.subr.bf16.mxu0 0
        %415 = vmatpush1.bf16.msra.mxu0 0
        %416 = vmatprep.mubr.bf16.mxu0 0
        %417 = vmatmul.mubr.bf16.gmra.mrb[0].mxu0 %v373
        %v418 = vpop.f32.mrb[0].mxu0
        %v419 = vadd.f32 0.0, %v418
        %v420 = vpop.f32.mrb[0].mxu0
        %v421 = vadd.f32 0.0, %v420
        %v422 = vpop.f32.mrb[0].mxu0
        %v423 = vpop.f32.mrb[0].mxu0
        %424 = vdwg.mxu0
        %425 = vmatprep.subr.bf16.mxu0 0
        %426 = vmatpush1.bf16.msra.mxu0 %v332
        %427 = vmatprep.subr.bf16.mxu0 0
        %428 = vmatpush1.bf16.msra.mxu0 %v344
        %429 = vmatprep.subr.bf16.mxu0 0
        %430 = vmatpush1.bf16.msra.mxu0 %v356
        %431 = vmatprep.subr.bf16.mxu0 0
        %432 = vmatpush1.bf16.msra.mxu0 %v368
        %433 = vmatprep.subr.bf16.mxu0 0
        %434 = vmatpush1.bf16.msra.mxu0 %v382
        %435 = vmatprep.subr.bf16.mxu0 0
        %436 = vmatpush1.bf16.msra.mxu0 0
        %437 = vmatprep.subr.bf16.mxu0 0
        %438 = vmatpush1.bf16.msra.mxu0 0
        %439 = vmatprep.subr.bf16.mxu0 0
        %440 = vmatpush1.bf16.msra.mxu0 0
        %441 = vmatprep.subr.bf16.mxu0 0
        %442 = vmatpush1.bf16.msra.mxu0 0
        %443 = vmatprep.subr.bf16.mxu0 0
        %444 = vmatpush1.bf16.msra.mxu0 0
        %445 = vmatprep.subr.bf16.mxu0 0
        %446 = vmatpush1.bf16.msra.mxu0 0
        %447 = vmatprep.subr.bf16.mxu0 0
        %448 = vmatpush1.bf16.msra.mxu0 0
        %449 = vmatprep.subr.bf16.mxu0 0
        %450 = vmatpush1.bf16.msra.mxu0 0
        %451 = vmatprep.subr.bf16.mxu0 0
        %452 = vmatpush1.bf16.msra.mxu0 0
        %453 = vmatprep.subr.bf16.mxu0 0
        %454 = vmatpush1.bf16.msra.mxu0 0
        %455 = vmatprep.subr.bf16.mxu0 0
        %456 = vmatpush1.bf16.msra.mxu0 0
        %457 = vmatprep.mubr.bf16.mxu0 0
        %458 = vmatmul.mubr.bf16.gmra.mrb[0].mxu0 %v373
        %v459 = vpop.f32.mrb[0].mxu0
        %v460 = vadd.f32 0.0, %v459
        %v461 = vpop.f32.mrb[0].mxu0
        %v462 = vpop.f32.mrb[0].mxu0
        %v463 = vpop.f32.mrb[0].mxu0
        %464 = vdwg.mxu0
        %465 = vst [vmem:[%s210] sm:$0xff] %v419
        %466 = vst [vmem:[%s210 + $0x8] sm:$0xff] %v421
        %467 = vst [vmem:[%s210 + $0x10] sm:$0xff] %v460
        %s468 = sand.u32 %s96, 1
        %s469 = scalar_lea.sflag [#allocation4], %s468
        %s470 = sand.u32 %s96, 1
        %s471 = smul.addr %s470, 24
        %s472 = scalar_lea.vmem [#allocation7], %s471
        // Predicated region
        $region37: #{tpu_custom_call.1} parent=27 // pred_check
          %p473 = pneg %p106
        $region38: #{tpu_custom_call.1} parent=27 // pred_check_branch
          %475 = sbr.rel (%p473) target = $region40
        $region39: #{tpu_custom_call.1} parent=27 // pred_region
          %s476 = smul.u32 3, %s27
          %s478 = ssub.s32 384, 384
          %479 = vsyncadd %s469, %s478
          %s480 = smul.addr %s26, 3
          %s481 = sadd.s32 %s476, %s480
          %s482 = smul.addr %s481, 128
          %s483 = scalar_lea.hbm %s2, %s482
          %s485 = sshll.u32 %s472, 4
          %s486 = int_to_ptr.vmem [resolvable:$true] %s485
          %488 = dma.vmem_to_hbm [thread:$0]  %s486, 384, %s483, %s469
        $region40: #{tpu_custom_call.1} parent=27 // pred_fallthru
          _
      $region28: #{tpu_custom_call.1} parent=5 // pred_fallthru
        _
      %p489 = scmp.le.s32.totalorder 2, %s17
      // Predicated region
      $region41: #{tpu_custom_call.1} parent=5 // pred_check
        %p490 = pneg %p489
      $region42: #{tpu_custom_call.1} parent=5 // pred_check_branch
        %492 = sbr.rel (%p490) target = $region44
      $region43: #{tpu_custom_call.1} parent=5 // pred_region
        %s493 = ssub.s32 %s17, 2
        // Predicated region
        $region45: #{tpu_custom_call.1} parent=43 // pred_check
          %p494 = pneg %p112
        $region46: #{tpu_custom_call.1} parent=43 // pred_check_branch
          %496 = sbr.rel (%p494) target = $region48
        $region47: #{tpu_custom_call.1} parent=43 // pred_region
          %s497 = sand.u32 %s97, 1
          %s498 = scalar_lea.sflag [#allocation4], %s497
          %s499 = sand.u32 %s97, 1
          %s500 = smul.addr %s499, 24
          %s501 = scalar_lea.vmem [#allocation7], %s500
          %502 = dma.done %s498, 384
        $region48: #{tpu_custom_call.1} parent=43 // pred_fallthru
          _
      $region44: #{tpu_custom_call.1} parent=5 // pred_fallthru
        _
    $region6: #{tpu_custom_call.1} parent=1 // loop_footer
      %s21 = sadd.s32 1, %s17
    $region7: #{tpu_custom_call.1} parent=1 // loop_footer_branch
      %16 = sbr.rel target = $region3
    $region8: #{tpu_custom_call.1} parent=1 // loop_exit
      _
    %503 = vsyncpa [#allocation3], 1
    %s504 = scalar_lea.sflag [#allocation3], 1
    %505 = vsyncpa %s504, 1
    %506 = vsyncpa [#allocation6], 1
    %s507 = scalar_lea.sflag [#allocation6], 1
    %508 = vsyncpa %s507, 1
    %509 = vsyncpa [#allocation4], 1
    %s510 = scalar_lea.sflag [#allocation4], 1
    %511 = vsyncpa %s510, 1

</llo_original>
